<compile_context>
chip_gen: v5e
topology: v5e:2x2
jax: 0.10.0
libtpu: 0.0.40
codegen_flags: <defaults>
</compile_context>

<pallas_src>
import functools
import math

import jax
import jax.numpy as jnp
from jax import lax
from jax.experimental import pallas as pl
from jax.experimental.pallas import tpu as pltpu


# ---------------------------------------------------------------------------
# Kernel body (shared by masked / no-mask variants).
# Blocks (leading batch dim squeezed): q (tq, D), k (tk, D), v (tk, Dv),
# mask (tq, tk) bool/int8, out (tq, Dv).  Scratch m/l/acc persist across the
# Lk ("arbitrary") grid axis.
# ---------------------------------------------------------------------------
def _attn_body(q_ref, k_ref, v_ref, mask_ref, o_ref, m_sc, l_sc, acc_sc, *,
               scale, mxu_bf16, approx_recip):
    ki = pl.program_id(2)

    @pl.when(ki == 0)
    def _init():
        m_sc[...] = jnp.full(m_sc.shape, -jnp.inf, dtype=jnp.float32)
        l_sc[...] = jnp.zeros(l_sc.shape, dtype=jnp.float32)
        acc_sc[...] = jnp.zeros(acc_sc.shape, dtype=jnp.float32)

    in_dtype = q_ref.dtype
    mxu_dtype = jnp.bfloat16 if (mxu_bf16 and in_dtype == jnp.float32) else in_dtype

    # Fold 1/sqrt(dk) into Q: O(tq*D) multiplies (in f32), then cast to the
    # MXU operand dtype.  bf16 inputs -> one extra rounding of Q (benign).
    q = (q_ref[...].astype(jnp.float32) * scale).astype(mxu_dtype)   # (tq, D)
    k = k_ref[...].astype(mxu_dtype)                                 # (tk, D)
    v = v_ref[...]                                                   # (tk, Dv)

    # Q @ K^T without materializing a transpose: contract the last dims.
    s = lax.dot_general(q, k, (((1,), (1,)), ((), ())),
                        preferred_element_type=jnp.float32)          # (tq, tk) f32

    if mask_ref is not None:
        m = mask_ref[...]
        cond = m if m.dtype == jnp.bool_ else (m != 0)
        # nonzero / True == masked-out (matches torch.masked_fill_).
        s = jnp.where(cond, jnp.float32(-100000000.0), s)

    # Online (flash) softmax update, all elementwise work in f32.
    # TODO(synk): if profiling shows the XLUs saturating before the MXU, the
    # row-sum of p can be moved onto the MXU via an appended ones-column in V.
    m_prev = m_sc[...]
    m_new = jnp.maximum(m_prev, jnp.max(s, axis=-1, keepdims=True))
    alpha = jnp.exp(m_prev - m_new)
    p = jnp.exp(s - m_new)
    l_sc[...] = alpha * l_sc[...] + jnp.sum(p, axis=-1, keepdims=True)
    acc_sc[...] = alpha * acc_sc[...] + jnp.dot(
        p.astype(mxu_dtype), v.astype(mxu_dtype),
        preferred_element_type=jnp.float32)
    m_sc[...] = m_new

    @pl.when(ki == pl.num_programs(2) - 1)
    def _finalize():
        if approx_recip:
            inv_l = pl.reciprocal(l_sc[...], approx=True)   # EUP slot, ~free
            o_ref[...] = (acc_sc[...] * inv_l).astype(o_ref.dtype)
        else:
            o_ref[...] = (acc_sc[...] / l_sc[...]).astype(o_ref.dtype)


def _attn_kernel_masked(q_ref, k_ref, v_ref, mask_ref, o_ref,
                        m_sc, l_sc, acc_sc, **kw):
    _attn_body(q_ref, k_ref, v_ref, mask_ref, o_ref, m_sc, l_sc, acc_sc, **kw)


def _attn_kernel_nomask(q_ref, k_ref, v_ref, o_ref,
                        m_sc, l_sc, acc_sc, **kw):
    _attn_body(q_ref, k_ref, v_ref, None, o_ref, m_sc, l_sc, acc_sc, **kw)


def _choose_tile(length, target, aligns):
    """Largest block <= target that divides `length` and is a multiple of one
    of `aligns` (tried in preference order); falls back to the full length,
    which is always a legal block."""
    if length <= target:
        return length
    for align in aligns:
        t = (min(target, length) // align) * align
        while t >= align:
            if length % t == 0:
                return t
            t -= align
    return length


def _vmem_limit_bytes(tq, tk, D, Dv, in_bytes, mask_bytes, has_mask):
    """Scoped-VMEM limit derived from the actual working set (v7x-safe)."""
    blk = (tq * D + tk * D + tk * Dv + tq * Dv) * in_bytes
    if has_mask:
        blk += tq * tk * mask_bytes
    scratch = 2 * tq * 128 * 4 + tq * max(Dv, 128) * 4          # m, l, acc (padded)
    internal = 3 * tq * tk * 4                                  # s / p f32 temporaries
    need = 2 * blk + scratch + internal                         # 2x = double buffering
    limit = int(need * 1.5)                                     # safety margin
    return int(min(max(limit, 32 * 1024 * 1024), 48 * 1024 * 1024))


def attention(Q, K, V, mask=None, dk=64, *, tq_target=512, tk_target=1024,
              mxu_bf16=False, approx_recip=True):
    """Pallas TPU equivalent of Attention.forward(Q, K, V, mask, dk)."""
    B, Lq, D = Q.shape
    Bk, Lk, Dk = K.shape
    Bv, Lkv, Dv = V.shape
    assert (B, D) == (Bk, Dk) and (B, Lk) == (Bv, Lkv)

    scale = 1.0 / math.sqrt(dk)

    # tq: multiples of 256 preferred (v6e/v7x MXU), then 128 / 32 (sublane
    # packing for bf16 / int8 mask).  tk: lane-dense, multiples of 256/128.
    tq = _choose_tile(Lq, tq_target, (256, 128, 32))
    tk = _choose_tile(Lk, tk_target, (256, 128))

    # Megacore guard: make sure the two "parallel" axes (B, qi) expose at
    # least 2 work units so both v7x TensorCores are busy.
    if B * (Lq // tq) < 2:
        tq_half = _choose_tile(Lq, max(tq // 2, 8), (256, 128, 32, 8))
        if tq_half < tq and B * (Lq // tq_half) >= 2:
            tq = tq_half

    grid = (B, Lq // tq, Lk // tk)

    in_specs = [
        pl.BlockSpec((pl.Squeezed(), tq, D), lambda b, qi, ki: (b, qi, 0)),
        pl.BlockSpec((pl.Squeezed(), tk, D), lambda b, qi, ki: (b, ki, 0)),
        pl.BlockSpec((pl.Squeezed(), tk, Dv), lambda b, qi, ki: (b, ki, 0)),
    ]
    args = [Q, K, V]

    in_bytes = jnp.dtype(Q.dtype).itemsize
    mask_bytes = 1
    if mask is not None:
        assert mask.shape == (B, Lq, Lk)
        if mask.dtype == jnp.bool_ or jnp.dtype(mask.dtype).itemsize == 1:
            mask_arr = mask                      # bool is already 1 byte: no cast copy
        else:
            mask_arr = mask.astype(jnp.int8)     # 4x fewer HBM bytes than f32
        mask_bytes = jnp.dtype(mask_arr.dtype).itemsize
        in_specs.append(
            pl.BlockSpec((pl.Squeezed(), tq, tk), lambda b, qi, ki: (b, qi, ki)))
        args.append(mask_arr)
        kernel = functools.partial(_attn_kernel_masked, scale=scale,
                                   mxu_bf16=mxu_bf16, approx_recip=approx_recip)
    else:
        kernel = functools.partial(_attn_kernel_nomask, scale=scale,
                                   mxu_bf16=mxu_bf16, approx_recip=approx_recip)

    vmem_limit = _vmem_limit_bytes(tq, tk, D, Dv, in_bytes, mask_bytes,
                                   mask is not None)

    return pl.pallas_call(
        kernel,
        out_shape=jax.ShapeDtypeStruct((B, Lq, Dv), Q.dtype),
        grid_spec=pltpu.PrefetchScalarGridSpec(
            num_scalar_prefetch=0,
            grid=grid,
            in_specs=in_specs,
            out_specs=pl.BlockSpec((pl.Squeezed(), tq, Dv),
                                   lambda b, qi, ki: (b, qi, 0)),
            scratch_shapes=[
                pltpu.VMEM((tq, 1), jnp.float32),    # running row max  m
                pltpu.VMEM((tq, 1), jnp.float32),    # running denom    l
                pltpu.VMEM((tq, Dv), jnp.float32),   # running output   acc
            ],
        ),
        compiler_params=pltpu.CompilerParams(
            dimension_semantics=("parallel", "parallel", "arbitrary"),
            vmem_limit_bytes=vmem_limit,
        ),
    )(*args)


def _reference(Q, K, V, mask=None, dk=64):
    w = jnp.einsum("bqd,bkd->bqk", Q.astype(jnp.float32), K.astype(jnp.float32))
    if mask is not None:
        w = jnp.where(mask, -100000000.0, w)
    w = jax.nn.softmax(w / math.sqrt(dk), axis=-1)
    return jnp.einsum("bqk,bkd->bqd", w, V.astype(jnp.float32))


if __name__ == "__main__":
    key = jax.random.PRNGKey(0)
    kq, kk, kv, km = jax.random.split(key, 4)

    # ---- small shapes consistent with the module's bmm signature ----
    B, Lq, Lk, D, Dv = 2, 8, 8, 32, 32
    dk = 64

    Q = jax.random.normal(kq, (B, Lq, D), dtype=jnp.float32)
    K = jax.random.normal(kk, (B, Lk, D), dtype=jnp.float32)
    V = jax.random.normal(kv, (B, Lk, Dv), dtype=jnp.float32)
    mask = jax.random.bernoulli(km, p=0.25, shape=(B, Lq, Lk))
    mask = mask.at[0, 3, :].set(True)   # exercise a fully-masked row

    out = attention(Q, K, V, mask=mask, dk=dk)     # bool mask passed through
    jax.block_until_ready(out)
    ref = _reference(Q, K, V, mask=mask, dk=dk)
    assert out.shape == (B, Lq, Dv)
    assert jnp.allclose(out, ref, atol=5e-3, rtol=5e-3), "mismatch (masked)"

    # mask=None path: separate kernel, no mask stream DMA'd at all.
    out2 = attention(Q, K, V, mask=None, dk=dk)
    jax.block_until_ready(out2)
    ref2 = _reference(Q, K, V, mask=None, dk=dk)
    assert jnp.allclose(out2, ref2, atol=5e-3, rtol=5e-3), "mismatch (no mask)"

    # bf16 inputs -> bf16 MXU matmuls with f32 accumulation.
    out3 = attention(Q.astype(jnp.bfloat16), K.astype(jnp.bfloat16),
                     V.astype(jnp.bfloat16), mask=mask, dk=dk)
    jax.block_until_ready(out3)
    assert jnp.allclose(out3.astype(jnp.float32), ref,
                        atol=5e-2, rtol=5e-2), "mismatch (bf16)"

    # Multi-tile path: several Lq and Lk blocks -> exercises online softmax
    # across grid steps (small tile targets forced for test coverage only).
    B2, Lq2, Lk2, D2, Dv2 = 2, 128, 256, 64, 64
    kq2, kk2, kv2, km2 = jax.random.split(jax.random.PRNGKey(1), 4)
    Q2 = jax.random.normal(kq2, (B2, Lq2, D2), dtype=jnp.float32)
    K2 = jax.random.normal(kk2, (B2, Lk2, D2), dtype=jnp.float32)
    V2 = jax.random.normal(kv2, (B2, Lk2, Dv2), dtype=jnp.float32)
    mask2 = jax.random.bernoulli(km2, p=0.25, shape=(B2, Lq2, Lk2))
    out4 = attention(Q2, K2, V2, mask=mask2, dk=dk,
                     tq_target=64, tk_target=128)   # grid = (2, 2, 2)
    jax.block_until_ready(out4)
    ref4 = _reference(Q2, K2, V2, mask=mask2, dk=dk)
    assert jnp.allclose(out4, ref4, atol=5e-3, rtol=5e-3), "mismatch (tiled)"

    # bf16-MXU path for f32 inputs (v5e/v6e throughput option), exact recip.
    out5 = attention(Q2, K2, V2, mask=mask2, dk=dk, tq_target=64,
                     tk_target=128, mxu_bf16=True, approx_recip=False)
    jax.block_until_ready(out5)
    assert jnp.allclose(out5, ref4, atol=5e-2, rtol=5e-2), "mismatch (mxu_bf16)"

    print("KERNEL_OK")
</pallas_src>

<mosaic_0001>
module attributes {stable_mosaic.version = 11 : i64} {
  func.func @_attn_kernel_masked(%arg0: i32, %arg1: i32, %arg2: i32, %arg3: memref<1x8x32xf32, #tpu.memory_space<vmem>>, %arg4: memref<1x8x32xf32, #tpu.memory_space<vmem>>, %arg5: memref<1x8x32xf32, #tpu.memory_space<vmem>>, %arg6: memref<1x8x8xi32, #tpu.memory_space<vmem>>, %arg7: memref<1x8x32xf32, #tpu.memory_space<vmem>>, %arg8: memref<8x1xf32, #tpu.memory_space<vmem>>, %arg9: memref<8x1xf32, #tpu.memory_space<vmem>>, %arg10: memref<8x32xf32, #tpu.memory_space<vmem>>) attributes {dimension_semantics = [#tpu.dimension_semantics<parallel>, #tpu.dimension_semantics<parallel>, #tpu.dimension_semantics<arbitrary>], iteration_bounds = array<i64: 2, 1, 1>, scalar_prefetch = 0 : i64, scratch_operands = 3 : i64, tpu.core_type = #tpu.core_type<tc>, window_params = [{transform_indices = @transform_0, window_bounds = array<i64: 1, 8, 32>}, {transform_indices = @transform_1, window_bounds = array<i64: 1, 8, 32>}, {transform_indices = @transform_2, window_bounds = array<i64: 1, 8, 32>}, {transform_indices = @transform_3, window_bounds = array<i64: 1, 8, 8>}, {transform_indices = @transform_4, window_bounds = array<i64: 1, 8, 32>}]} {
    %c0_i32 = arith.constant 0 : i32
    %0 = arith.cmpi eq, %arg2, %c0_i32 : i32
    %1 = arith.extui %0 : i1 to i32
    %c0_i32_0 = arith.constant 0 : i32
    %2 = arith.cmpi ne, %1, %c0_i32_0 : i32
    scf.if %2 {
      %cst_32 = arith.constant 0xFF800000 : f32
      %42 = vector.broadcast %cst_32 : f32 to vector<8x1xf32>
      %c0_33 = arith.constant 0 : index
      %c0_34 = arith.constant 0 : index
      %43 = vector.load %arg8[%c0_33, %c0_34] : memref<8x1xf32, #tpu.memory_space<vmem>>, vector<8x1xf32>
      tpu.vector_store %arg8[%c0_33, %c0_34], %42 {strides = array<i32>} : memref<8x1xf32, #tpu.memory_space<vmem>>, vector<8x1xf32>,
      %cst_35 = arith.constant 0.000000e+00 : f32
      %44 = vector.broadcast %cst_35 : f32 to vector<8x1xf32>
      %c0_36 = arith.constant 0 : index
      %c0_37 = arith.constant 0 : index
      %45 = vector.load %arg9[%c0_36, %c0_37] : memref<8x1xf32, #tpu.memory_space<vmem>>, vector<8x1xf32>
      tpu.vector_store %arg9[%c0_36, %c0_37], %44 {strides = array<i32>} : memref<8x1xf32, #tpu.memory_space<vmem>>, vector<8x1xf32>,
      %cst_38 = arith.constant 0.000000e+00 : f32
      %46 = vector.broadcast %cst_38 : f32 to vector<8x32xf32>
      %c0_39 = arith.constant 0 : index
      %c0_40 = arith.constant 0 : index
      %47 = vector.load %arg10[%c0_39, %c0_40] : memref<8x32xf32, #tpu.memory_space<vmem>>, vector<8x32xf32>
      tpu.vector_store %arg10[%c0_39, %c0_40], %46 {strides = array<i32>} : memref<8x32xf32, #tpu.memory_space<vmem>>, vector<8x32xf32>,
    } else {
    }
    %c0 = arith.constant 0 : index
    %c0_1 = arith.constant 0 : index
    %c0_2 = arith.constant 0 : index
    %3 = vector.load %arg3[%c0, %c0_1, %c0_2] : memref<1x8x32xf32, #tpu.memory_space<vmem>>, vector<1x8x32xf32>
    %4 = vector.shape_cast %3 : vector<1x8x32xf32> to vector<8x32xf32>
    %cst = arith.constant 1.250000e-01 : f32
    %5 = vector.broadcast %cst : f32 to vector<8x32xf32>
    %6 = arith.mulf %4, %5 : vector<8x32xf32>
    %c0_3 = arith.constant 0 : index
    %c0_4 = arith.constant 0 : index
    %c0_5 = arith.constant 0 : index
    %7 = vector.load %arg4[%c0_3, %c0_4, %c0_5] : memref<1x8x32xf32, #tpu.memory_space<vmem>>, vector<1x8x32xf32>
    %8 = vector.shape_cast %7 : vector<1x8x32xf32> to vector<8x32xf32>
    %c0_6 = arith.constant 0 : index
    %c0_7 = arith.constant 0 : index
    %c0_8 = arith.constant 0 : index
    %9 = vector.load %arg5[%c0_6, %c0_7, %c0_8] : memref<1x8x32xf32, #tpu.memory_space<vmem>>, vector<1x8x32xf32>
    %10 = vector.shape_cast %9 : vector<1x8x32xf32> to vector<8x32xf32>
    %cst_9 = arith.constant dense<0.000000e+00> : vector<8x8xf32>
    %11 = tpu.matmul %6, %8, %cst_9 {dimension_numbers = #tpu.dot_dimension_numbers<[1], [1], [0], [0], [0, 0, 1, 0], [], []>} : vector<8x32xf32>, vector<8x32xf32>, vector<8x8xf32> -> vector<8x8xf32>
    %c0_10 = arith.constant 0 : index
    %c0_11 = arith.constant 0 : index
    %c0_12 = arith.constant 0 : index
    %12 = vector.load %arg6[%c0_10, %c0_11, %c0_12] : memref<1x8x8xi32, #tpu.memory_space<vmem>>, vector<1x8x8xi32>
    %13 = vector.shape_cast %12 : vector<1x8x8xi32> to vector<8x8xi32>
    %cst_13 = arith.constant dense<0> : vector<8x8xi32>
    %14 = arith.cmpi ne, %13, %cst_13 : vector<8x8xi32>
    %cst_14 = arith.constant -1.000000e+08 : f32
    %15 = vector.broadcast %cst_14 : f32 to vector<8x8xf32>
    %16 = arith.select %14, %15, %11 : vector<8x8xi1>, vector<8x8xf32>
    %c0_15 = arith.constant 0 : index
    %c0_16 = arith.constant 0 : index
    %17 = vector.load %arg8[%c0_15, %c0_16] : memref<8x1xf32, #tpu.memory_space<vmem>>, vector<8x1xf32>
    %cst_17 = arith.constant dense<0xFF800000> : vector<8xf32>
    %18 = vector.multi_reduction <maximumf>, %16, %cst_17 [1] : vector<8x8xf32> to vector<8xf32>
    %19 = vector.shape_cast %18 : vector<8xf32> to vector<8x1xf32>
    %20 = arith.maximumf %17, %19 : vector<8x1xf32>
    %21 = arith.subf %17, %20 : vector<8x1xf32>
    %22 = math.exp %21 : vector<8x1xf32>
    %23 = vector.broadcast %20 : vector<8x1xf32> to vector<8x8xf32>
    %24 = arith.subf %16, %23 : vector<8x8xf32>
    %25 = math.exp %24 : vector<8x8xf32>
    %c0_18 = arith.constant 0 : index
    %c0_19 = arith.constant 0 : index
    %26 = vector.load %arg9[%c0_18, %c0_19] : memref<8x1xf32, #tpu.memory_space<vmem>>, vector<8x1xf32>
    %27 = arith.mulf %22, %26 : vector<8x1xf32>
    %cst_20 = arith.constant dense<0.000000e+00> : vector<8xf32>
    %28 = vector.multi_reduction <add>, %25, %cst_20 [1] : vector<8x8xf32> to vector<8xf32>
    %29 = vector.shape_cast %28 : vector<8xf32> to vector<8x1xf32>
    %30 = arith.addf %27, %29 : vector<8x1xf32>
    %c0_21 = arith.constant 0 : index
    %c0_22 = arith.constant 0 : index
    %31 = vector.load %arg9[%c0_21, %c0_22] : memref<8x1xf32, #tpu.memory_space<vmem>>, vector<8x1xf32>
    tpu.vector_store %arg9[%c0_21, %c0_22], %30 {strides = array<i32>} : memref<8x1xf32, #tpu.memory_space<vmem>>, vector<8x1xf32>,
    %c0_23 = arith.constant 0 : index
    %c0_24 = arith.constant 0 : index
    %32 = vector.load %arg10[%c0_23, %c0_24] : memref<8x32xf32, #tpu.memory_space<vmem>>, vector<8x32xf32>
    %33 = vector.broadcast %22 : vector<8x1xf32> to vector<8x32xf32>
    %34 = arith.mulf %33, %32 : vector<8x32xf32>
    %cst_25 = arith.constant dense<0.000000e+00> : vector<8x32xf32>
    %35 = tpu.matmul %25, %10, %cst_25 {dimension_numbers = #tpu.dot_dimension_numbers<[1], [0], [0], [1], [0, 0, 1, 1], [], []>} : vector<8x8xf32>, vector<8x32xf32>, vector<8x32xf32> -> vector<8x32xf32>
    %36 = arith.addf %34, %35 : vector<8x32xf32>
    %c0_26 = arith.constant 0 : index
    %c0_27 = arith.constant 0 : index
    %37 = vector.load %arg10[%c0_26, %c0_27] : memref<8x32xf32, #tpu.memory_space<vmem>>, vector<8x32xf32>
    tpu.vector_store %arg10[%c0_26, %c0_27], %36 {strides = array<i32>} : memref<8x32xf32, #tpu.memory_space<vmem>>, vector<8x32xf32>,
    %c0_28 = arith.constant 0 : index
    %c0_29 = arith.constant 0 : index
    %38 = vector.load %arg8[%c0_28, %c0_29] : memref<8x1xf32, #tpu.memory_space<vmem>>, vector<8x1xf32>
    tpu.vector_store %arg8[%c0_28, %c0_29], %20 {strides = array<i32>} : memref<8x1xf32, #tpu.memory_space<vmem>>, vector<8x1xf32>,
    %c0_i32_30 = arith.constant 0 : i32
    %39 = arith.cmpi eq, %arg2, %c0_i32_30 : i32
    %40 = arith.extui %39 : i1 to i32
    %c0_i32_31 = arith.constant 0 : i32
    %41 = arith.cmpi ne, %40, %c0_i32_31 : i32
    scf.if %41 {
      %c0_32 = arith.constant 0 : index
      %c0_33 = arith.constant 0 : index
      %42 = vector.load %arg9[%c0_32, %c0_33] : memref<8x1xf32, #tpu.memory_space<vmem>>, vector<8x1xf32>
      %43 = tpu.reciprocal %42 {approx = true} : vector<8x1xf32> -> vector<8x1xf32>
      %c0_34 = arith.constant 0 : index
      %c0_35 = arith.constant 0 : index
      %44 = vector.load %arg10[%c0_34, %c0_35] : memref<8x32xf32, #tpu.memory_space<vmem>>, vector<8x32xf32>
      %45 = vector.broadcast %43 : vector<8x1xf32> to vector<8x32xf32>
      %46 = arith.mulf %44, %45 : vector<8x32xf32>
      %c0_36 = arith.constant 0 : index
      %c0_37 = arith.constant 0 : index
      %c0_38 = arith.constant 0 : index
      %47 = vector.load %arg7[%c0_36, %c0_37, %c0_38] : memref<1x8x32xf32, #tpu.memory_space<vmem>>, vector<1x8x32xf32>
      %48 = vector.shape_cast %47 : vector<1x8x32xf32> to vector<8x32xf32>
      %49 = vector.shape_cast %46 : vector<8x32xf32> to vector<1x8x32xf32>
      tpu.vector_store %arg7[%c0_36, %c0_37, %c0_38], %49 {strides = array<i32>} : memref<1x8x32xf32, #tpu.memory_space<vmem>>, vector<1x8x32xf32>,
    } else {
    }
    return
  }
  func.func @transform_0(%arg0: i32, %arg1: i32, %arg2: i32) -> (i32, i32, i32) {
    %c0_i32 = arith.constant 0 : i32
    %c0_i32_0 = arith.constant 0 : i32
    return %arg0, %arg1, %c0_i32 : i32, i32, i32
  }
  func.func @transform_1(%arg0: i32, %arg1: i32, %arg2: i32) -> (i32, i32, i32) {
    %c0_i32 = arith.constant 0 : i32
    %c0_i32_0 = arith.constant 0 : i32
    return %arg0, %arg2, %c0_i32 : i32, i32, i32
  }
  func.func @transform_2(%arg0: i32, %arg1: i32, %arg2: i32) -> (i32, i32, i32) {
    %c0_i32 = arith.constant 0 : i32
    %c0_i32_0 = arith.constant 0 : i32
    return %arg0, %arg2, %c0_i32 : i32, i32, i32
  }
  func.func @transform_3(%arg0: i32, %arg1: i32, %arg2: i32) -> (i32, i32, i32) {
    %c0_i32 = arith.constant 0 : i32
    return %arg0, %arg1, %arg2 : i32, i32, i32
  }
  func.func @transform_4(%arg0: i32, %arg1: i32, %arg2: i32) -> (i32, i32, i32) {
    %c0_i32 = arith.constant 0 : i32
    %c0_i32_0 = arith.constant 0 : i32
    return %arg0, %arg1, %c0_i32 : i32, i32, i32
  }
}

</mosaic_0001>

<llo_original>
// kernel: tpu_custom_call.1
$region0: #{tpu_custom_call.1}
  #allocation0 [shape = 'u32[]', space=smem, size = 0x4, offset = 0x4, fixed_abs, tag = 'smem constant byte address 0x4 - core index']
  #allocation1 [shape = 'u32[72,128]{1,0:T(1,128)}', space=vmem, size = 0x9000, scoped, tag = 'internal scratch']
  #allocation2 [shape = 'f32[8,1]{1,0:T(8,128)}', space=vmem, size = 0x1000, scoped, tag = 'scratch operand']
  #allocation3 [shape = 'f32[8,1]{1,0:T(8,128)}', space=vmem, size = 0x1000, scoped, tag = 'scratch operand']
  #allocation4 [shape = 'f32[8,32]{1,0:T(8,128)}', space=vmem, size = 0x1000, scoped, tag = 'scratch operand']
  %s0 = inlined_call_operand.vmem [shape: f32[2,8,32], index: 0, kind: input, shape index: {}]
  %s1 = inlined_call_operand.hbm [shape: f32[2,8,32], index: 1, kind: input, shape index: {}]
  %s2 = inlined_call_operand.hbm [shape: f32[2,8,32], index: 2, kind: input, shape index: {}]
  %s3 = inlined_call_operand.vmem [shape: s32[2,8,8], index: 3, kind: input, shape index: {}]
  %s4 = inlined_call_operand.hbm [shape: f32[2,8,32], index: 4, kind: output, shape index: {}]
  %s5 = sld [smem:[#allocation0]]
  $region65: #{tpu_custom_call.1} parent=0
    _
  %s7 = ssub.s32 1, %s5
  %s8 = scalar_select 0, %s7, %s5
  $region1: #{tpu_custom_call.1} parent=0
    #allocation5 [shape = 'u8[8192]{0}', space=vmem, size = 0x2000, scoped, tag = 'input window, operand 1']
    #allocation6 [shape = 's32[2]{0}', space=sflag, size = 0x8, scoped, tag = 'scoped memory for tpu_custom_call.1']
    #allocation7 [shape = 's32[2]{0}', space=sflag, size = 0x8, scoped, tag = 'scoped memory for tpu_custom_call.1']
    #allocation8 [shape = 'u8[8192]{0}', space=vmem, size = 0x2000, scoped, tag = 'input window, operand 2']
    #allocation9 [shape = 's32[2]{0}', space=sflag, size = 0x8, scoped, tag = 'scoped memory for tpu_custom_call.1']
    #allocation10 [shape = 'u8[8192]{0}', space=vmem, size = 0x2000, scoped, tag = 'output window, operand 0']
    %9 = vsyncpa [#allocation6], 0
    %s10 = scalar_lea.sflag [#allocation6], 1
    %11 = vsyncpa %s10, 0
    %12 = vsyncpa [#allocation9], 0
    %s13 = scalar_lea.sflag [#allocation9], 1
    %14 = vsyncpa %s13, 0
    %15 = vsyncpa [#allocation7], 0
    %s16 = scalar_lea.sflag [#allocation7], 1
    %17 = vsyncpa %s16, 0
    loop: start=0, step=1, limit=4
    $region2: #{tpu_custom_call.1} parent=1 // loop_pre_header
      _
    $region3: #{tpu_custom_call.1} parent=1 // loop_header
      %s19 = sphi 0, %s23
      %p20 = scmp.ge.s32.totalorder %s19, 4
      %s26 = sphi 0, %s45
      %s27 = sphi 0, %s41
      %s28 = sphi 0, %s37
      %s29 = sphi 0, %s26
      %s30 = sphi 0, %s27
      %s31 = sphi 0, %s28
      %s32 = sphi 0, %s29
      %s33 = sphi 0, %s30
      %s34 = sphi 0, %s31
      %s50 = sphi 0, %s52
      %s53 = sphi 0, %s50
      %s54 = sphi 0, %s53
      %s70 = sphi 0, %s54
      %s78 = sphi 0, %s80
      %s81 = sphi 0, %s78
      %s82 = sphi 0, %s81
      %s98 = sphi 0, %s82
      %s106 = sphi 0, %s108
      %s109 = sphi 0, %s106
      %s110 = sphi 0, %s109
      %s126 = sphi 0, %s110
      %s136 = sphi 0, %s138
      %s139 = sphi 0, %s136
      %s140 = sphi 0, %s139
      %s156 = sphi 0, %s140
      %s164 = sphi 0, %s166
      %s167 = sphi 0, %s164
      %s168 = sphi 0, %s167
      %s184 = sphi 0, %s168
    $region4: #{tpu_custom_call.1} parent=1 // loop_header_branch
      %22 = sbr.rel (%p20) target = $region8
    $region5: #{tpu_custom_call.1} parent=1 // loop_body
      %s24 = ssub.s32 %s19, 1
      %s25 = ssub.s32 %s19, 2
      %s35 = sadd.s32 1, %s28
      %p36 = scmp.ge.s32.totalorder %s35, 1
      %s37 = scalar_select %p36, 0, %s35
      %s38 = sadd.s32 1, %s27
      %s39 = scalar_select %p36, %s38, %s27
      %p40 = scmp.ge.s32.totalorder %s39, 1
      %s41 = scalar_select %p40, 0, %s39
      %s42 = sadd.s32 1, %s26
      %s43 = scalar_select %p40, %s42, %s26
      %p44 = scmp.ge.s32.totalorder %s43, 2
      %s45 = scalar_select %p44, 0, %s43
      %s46 = ssub.s32 %s26, %s45
      %s47 = ssub.s32 %s27, %s41
      %s48 = sor.u32 %s46, %s47
      %p49 = scmp.eq.s32.totalorder %s48, 0
      %s51 = sadd.s32 %s50, 1
      %s52 = scalar_select %p49, %s50, %s51
      %p55 = pneg %p49
      %p56 = scmp.eq.s32.totalorder %s19, 1
      %p57 = por %p55, %p56
      %p58 = scmp.ne.s32.totalorder %s50, %s53
      %p59 = scmp.eq.s32.totalorder %s19, 0
      %p60 = por %p58, %p59
      %p61 = scmp.ne.s32.totalorder %s50, %s53
      %p62 = scmp.eq.s32.totalorder %s24, 1
      %p63 = por %p61, %p62
      %p64 = scmp.ne.s32.totalorder %s53, %s54
      %p65 = scmp.eq.s32.totalorder %s24, 0
      %p66 = por %p64, %p65
      %p67 = scmp.ne.s32.totalorder %s53, %s54
      %p68 = scmp.eq.s32.totalorder %s25, 1
      %p69 = por %p67, %p68
      %p71 = scmp.ne.s32.totalorder %s54, %s70
      %p72 = scmp.eq.s32.totalorder %s25, 0
      %p73 = por %p71, %p72
      %s74 = ssub.s32 %s26, %s45
      %s75 = ssub.s32 %s28, %s37
      %s76 = sor.u32 %s74, %s75
      %p77 = scmp.eq.s32.totalorder %s76, 0
      %s79 = sadd.s32 %s78, 1
      %s80 = scalar_select %p77, %s78, %s79
      %p83 = pneg %p77
      %p84 = scmp.eq.s32.totalorder %s19, 1
      %p85 = por %p83, %p84
      %p86 = scmp.ne.s32.totalorder %s78, %s81
      %p87 = scmp.eq.s32.totalorder %s19, 0
      %p88 = por %p86, %p87
      %p89 = scmp.ne.s32.totalorder %s78, %s81
      %p90 = scmp.eq.s32.totalorder %s24, 1
      %p91 = por %p89, %p90
      %p92 = scmp.ne.s32.totalorder %s81, %s82
      %p93 = scmp.eq.s32.totalorder %s24, 0
      %p94 = por %p92, %p93
      %p95 = scmp.ne.s32.totalorder %s81, %s82
      %p96 = scmp.eq.s32.totalorder %s25, 1
      %p97 = por %p95, %p96
      %p99 = scmp.ne.s32.totalorder %s82, %s98
      %p100 = scmp.eq.s32.totalorder %s25, 0
      %p101 = por %p99, %p100
      %s102 = ssub.s32 %s26, %s45
      %s103 = ssub.s32 %s28, %s37
      %s104 = sor.u32 %s102, %s103
      %p105 = scmp.eq.s32.totalorder %s104, 0
      %s107 = sadd.s32 %s106, 1
      %s108 = scalar_select %p105, %s106, %s107
      %p111 = pneg %p105
      %p112 = scmp.eq.s32.totalorder %s19, 1
      %p113 = por %p111, %p112
      %p114 = scmp.ne.s32.totalorder %s106, %s109
      %p115 = scmp.eq.s32.totalorder %s19, 0
      %p116 = por %p114, %p115
      %p117 = scmp.ne.s32.totalorder %s106, %s109
      %p118 = scmp.eq.s32.totalorder %s24, 1
      %p119 = por %p117, %p118
      %p120 = scmp.ne.s32.totalorder %s109, %s110
      %p121 = scmp.eq.s32.totalorder %s24, 0
      %p122 = por %p120, %p121
      %p123 = scmp.ne.s32.totalorder %s109, %s110
      %p124 = scmp.eq.s32.totalorder %s25, 1
      %p125 = por %p123, %p124
      %p127 = scmp.ne.s32.totalorder %s110, %s126
      %p128 = scmp.eq.s32.totalorder %s25, 0
      %p129 = por %p127, %p128
      %s130 = ssub.s32 %s26, %s45
      %s131 = ssub.s32 %s27, %s41
      %s132 = sor.u32 %s130, %s131
      %s133 = ssub.s32 %s28, %s37
      %s134 = sor.u32 %s132, %s133
      %p135 = scmp.eq.s32.totalorder %s134, 0
      %s137 = sadd.s32 %s136, 1
      %s138 = scalar_select %p135, %s136, %s137
      %p141 = pneg %p135
      %p142 = scmp.eq.s32.totalorder %s19, 1
      %p143 = por %p141, %p142
      %p144 = scmp.ne.s32.totalorder %s136, %s139
      %p145 = scmp.eq.s32.totalorder %s19, 0
      %p146 = por %p144, %p145
      %p147 = scmp.ne.s32.totalorder %s136, %s139
      %p148 = scmp.eq.s32.totalorder %s24, 1
      %p149 = por %p147, %p148
      %p150 = scmp.ne.s32.totalorder %s139, %s140
      %p151 = scmp.eq.s32.totalorder %s24, 0
      %p152 = por %p150, %p151
      %p153 = scmp.ne.s32.totalorder %s139, %s140
      %p154 = scmp.eq.s32.totalorder %s25, 1
      %p155 = por %p153, %p154
      %p157 = scmp.ne.s32.totalorder %s140, %s156
      %p158 = scmp.eq.s32.totalorder %s25, 0
      %p159 = por %p157, %p158
      %s160 = ssub.s32 %s26, %s45
      %s161 = ssub.s32 %s27, %s41
      %s162 = sor.u32 %s160, %s161
      %p163 = scmp.eq.s32.totalorder %s162, 0
      %s165 = sadd.s32 %s164, 1
      %s166 = scalar_select %p163, %s164, %s165
      %p169 = pneg %p163
      %p170 = scmp.eq.s32.totalorder %s19, 1
      %p171 = por %p169, %p170
      %p172 = scmp.ne.s32.totalorder %s164, %s167
      %p173 = scmp.eq.s32.totalorder %s19, 0
      %p174 = por %p172, %p173
      %p175 = scmp.ne.s32.totalorder %s164, %s167
      %p176 = scmp.eq.s32.totalorder %s24, 1
      %p177 = por %p175, %p176
      %p178 = scmp.ne.s32.totalorder %s167, %s168
      %p179 = scmp.eq.s32.totalorder %s24, 0
      %p180 = por %p178, %p179
      %p181 = scmp.ne.s32.totalorder %s167, %s168
      %p182 = scmp.eq.s32.totalorder %s25, 1
      %p183 = por %p181, %p182
      %p185 = scmp.ne.s32.totalorder %s168, %s184
      %p186 = scmp.eq.s32.totalorder %s25, 0
      %p187 = por %p185, %p186
      %p188 = scmp.le.s32.totalorder 1, %s19
      %p189 = scmp.lt.s32.totalorder %s19, 3
      %p190 = pnand %p188, %p189
      %p191 = pneg %p190
      // Predicated region
      $region9: #{tpu_custom_call.1} parent=5 // pred_check
        _
      $region10: #{tpu_custom_call.1} parent=5 // pred_check_branch
        %193 = sbr.rel (%p190) target = $region12
      $region11: #{tpu_custom_call.1} parent=5 // pred_region
        %s194 = ssub.s32 %s19, 1
      $region12: #{tpu_custom_call.1} parent=5 // pred_fallthru
        _
      %p195 = scmp.lt.s32.totalorder %s19, 2
      // Predicated region
      $region13: #{tpu_custom_call.1} parent=5 // pred_check
        %p196 = pneg %p195
      $region14: #{tpu_custom_call.1} parent=5 // pred_check_branch
        %198 = sbr.rel (%p196) target = $region16
      $region15: #{tpu_custom_call.1} parent=5 // pred_region
        // Predicated region
        $region17: #{tpu_custom_call.1} parent=15 // pred_check
          %p199 = pneg %p60
        $region18: #{tpu_custom_call.1} parent=15 // pred_check_branch
          %201 = sbr.rel (%p199) target = $region20
        $region19: #{tpu_custom_call.1} parent=15 // pred_region
          %p202 = scmp.lt.s32.totalorder %s26, 1
          %s203 = scalar_select %p202, %s26, 1
          %p204 = scmp.lt.s32.totalorder %s27, 0
          %s205 = scalar_select %p204, %s27, 0
          %s206 = sadd.s32 %s205, %s203
          %s207 = smul.addr %s206, 8
          %s208 = scalar_lea.vmem %s0, %s207
        $region20: #{tpu_custom_call.1} parent=15 // pred_fallthru
          _
        // Predicated region
        $region21: #{tpu_custom_call.1} parent=15 // pred_check
          %p209 = pneg %p88
        $region22: #{tpu_custom_call.1} parent=15 // pred_check_branch
          %211 = sbr.rel (%p209) target = $region24
        $region23: #{tpu_custom_call.1} parent=15 // pred_region
          %s212 = sand.u32 %s78, 1
          %s213 = scalar_lea.sflag [#allocation6], %s212
          %s214 = sand.u32 %s78, 1
          %s215 = smul.addr %s214, 8
          %s216 = scalar_lea.vmem [#allocation5], %s215
          %218 = vsyncadd %s213, 0
          %s219 = sadd.s32 %s28, %s26
          %s220 = smul.addr %s219, 8
          %s221 = scalar_lea.hbm %s1, %s220
          %s223 = sshll.u32 %s221, 4
          %s224 = int_to_ptr.hbm [resolvable:$true] %s223
          %s225 = sshll.u32 %s216, 4
          %s226 = int_to_ptr.vmem [resolvable:$true] %s225
          %228 = dma.hbm_to_vmem [thread:$0]  %s224, 128, %s226, %s213
        $region24: #{tpu_custom_call.1} parent=15 // pred_fallthru
          _
        // Predicated region
        $region25: #{tpu_custom_call.1} parent=15 // pred_check
          %p229 = pneg %p116
        $region26: #{tpu_custom_call.1} parent=15 // pred_check_branch
          %231 = sbr.rel (%p229) target = $region28
        $region27: #{tpu_custom_call.1} parent=15 // pred_region
          %s232 = sand.u32 %s106, 1
          %s233 = scalar_lea.sflag [#allocation9], %s232
          %s234 = sand.u32 %s106, 1
          %s235 = smul.addr %s234, 8
          %s236 = scalar_lea.vmem [#allocation8], %s235
          %238 = vsyncadd %s233, 0
          %s239 = sadd.s32 %s28, %s26
          %s240 = smul.addr %s239, 8
          %s241 = scalar_lea.hbm %s2, %s240
          %s243 = sshll.u32 %s241, 4
          %s244 = int_to_ptr.hbm [resolvable:$true] %s243
          %s245 = sshll.u32 %s236, 4
          %s246 = int_to_ptr.vmem [resolvable:$true] %s245
          %248 = dma.hbm_to_vmem [thread:$0]  %s244, 128, %s246, %s233
        $region28: #{tpu_custom_call.1} parent=15 // pred_fallthru
          _
        // Predicated region
        $region29: #{tpu_custom_call.1} parent=15 // pred_check
          %p249 = pneg %p146
        $region30: #{tpu_custom_call.1} parent=15 // pred_check_branch
          %251 = sbr.rel (%p249) target = $region32
        $region31: #{tpu_custom_call.1} parent=15 // pred_region
          %p252 = scmp.lt.s32.totalorder %s26, 1
          %s253 = scalar_select %p252, %s26, 1
          %p254 = scmp.lt.s32.totalorder %s27, 0
          %s255 = scalar_select %p254, %s27, 0
          %p256 = scmp.lt.s32.totalorder %s28, 0
          %s257 = scalar_select %p256, %s28, 0
          %s258 = sadd.s32 %s257, %s255
          %s259 = sadd.s32 %s258, %s253
          %s260 = smul.addr %s259, 8
          %s261 = scalar_lea.vmem %s3, %s260
        $region32: #{tpu_custom_call.1} parent=15 // pred_fallthru
          _
      $region16: #{tpu_custom_call.1} parent=5 // pred_fallthru
        _
      %p262 = scmp.le.s32.totalorder 1, %s19
      %p263 = scmp.lt.s32.totalorder %s19, 3
      %p264 = pnand %p262, %p263
      %p265 = pneg %p264
      // Predicated region
      $region33: #{tpu_custom_call.1} parent=5 // pred_check
        _
      $region34: #{tpu_custom_call.1} parent=5 // pred_check_branch
        %267 = sbr.rel (%p264) target = $region36
      $region35: #{tpu_custom_call.1} parent=5 // pred_region
        %s268 = ssub.s32 %s19, 1
        %s269 = sand.u32 %s81, 1
        %s270 = scalar_lea.sflag [#allocation6], %s269
        %s271 = sand.u32 %s81, 1
        %s272 = smul.addr %s271, 8
        %s273 = scalar_lea.vmem [#allocation5], %s272
        // Predicated region
        $region37: #{tpu_custom_call.1} parent=35 // pred_check
          %p274 = pneg %p94
        $region38: #{tpu_custom_call.1} parent=35 // pred_check_branch
          %276 = sbr.rel (%p274) target = $region40
        $region39: #{tpu_custom_call.1} parent=35 // pred_region
          %278 = dma.done %s270, 128
        $region40: #{tpu_custom_call.1} parent=35 // pred_fallthru
          _
        %s279 = sand.u32 %s109, 1
        %s280 = scalar_lea.sflag [#allocation9], %s279
        %s281 = sand.u32 %s109, 1
        %s282 = smul.addr %s281, 8
        %s283 = scalar_lea.vmem [#allocation8], %s282
        // Predicated region
        $region41: #{tpu_custom_call.1} parent=35 // pred_check
          %p284 = pneg %p122
        $region42: #{tpu_custom_call.1} parent=35 // pred_check_branch
          %286 = sbr.rel (%p284) target = $region44
        $region43: #{tpu_custom_call.1} parent=35 // pred_region
          %288 = dma.done %s280, 128
        $region44: #{tpu_custom_call.1} parent=35 // pred_fallthru
          _
        %p289 = scmp.lt.s32.totalorder %s29, 1
        %s290 = scalar_select %p289, %s29, 1
        %p291 = scmp.lt.s32.totalorder %s30, 0
        %s292 = scalar_select %p291, %s30, 0
        %s293 = sadd.s32 %s292, %s290
        %s294 = smul.addr %s293, 8
        %s295 = scalar_lea.vmem %s0, %s294
        %p296 = pneg %p66
        %p297 = pneg %p63
        %s298 = sand.u32 %s81, 1
        %s299 = scalar_lea.sflag [#allocation6], %s298
        %s300 = sand.u32 %s81, 1
        %s301 = smul.addr %s300, 8
        %s302 = scalar_lea.vmem [#allocation5], %s301
        %p303 = pneg %p94
        %p304 = pneg %p91
        %s305 = sand.u32 %s109, 1
        %s306 = scalar_lea.sflag [#allocation9], %s305
        %s307 = sand.u32 %s109, 1
        %s308 = smul.addr %s307, 8
        %s309 = scalar_lea.vmem [#allocation8], %s308
        %p310 = pneg %p122
        %p311 = pneg %p119
        %p312 = scmp.lt.s32.totalorder %s29, 1
        %s313 = scalar_select %p312, %s29, 1
        %p314 = scmp.lt.s32.totalorder %s30, 0
        %s315 = scalar_select %p314, %s30, 0
        %p316 = scmp.lt.s32.totalorder %s31, 0
        %s317 = scalar_select %p316, %s31, 0
        %s318 = sadd.s32 %s317, %s315
        %s319 = sadd.s32 %s318, %s313
        %s320 = smul.addr %s319, 8
        %s321 = scalar_lea.vmem %s3, %s320
        %p322 = pneg %p152
        %p323 = pneg %p149
        %p324 = pneg %p180
        %p325 = pneg %p177
        %s326 = sand.u32 %s167, 1
        %s327 = scalar_lea.sflag [#allocation7], %s326
        %s328 = sand.u32 %s167, 1
        %s329 = smul.addr %s328, 8
        %s330 = scalar_lea.vmem [#allocation10], %s329
        %p331 = scmp.lt.s32.totalorder %s29, 1
        %s332 = scalar_select %p331, %s29, 1
        %p333 = scmp.lt.s32.totalorder %s30, 0
        %s334 = scalar_select %p333, %s30, 0
        %s335 = sadd.s32 %s334, %s332
        %s336 = smul.addr %s335, 8
        %s337 = scalar_lea.vmem %s0, %s336
        %p338 = scmp.lt.s32.totalorder %s29, 1
        %s339 = scalar_select %p338, %s29, 1
        %p340 = scmp.lt.s32.totalorder %s30, 0
        %s341 = scalar_select %p340, %s30, 0
        %p342 = scmp.lt.s32.totalorder %s31, 0
        %s343 = scalar_select %p342, %s31, 0
        %s344 = sadd.s32 %s343, %s341
        %s345 = sadd.s32 %s344, %s339
        %s346 = smul.addr %s345, 8
        %s347 = scalar_lea.vmem %s3, %s346
        %p348 = scmp.eq.s32.totalorder %s31, 0
        // Predicated region
        $region45: #{tpu_custom_call.1} parent=35 // pred_check
          %p349 = pneg %p348
        $region46: #{tpu_custom_call.1} parent=35 // pred_check_branch
          %351 = sbr.rel (%p349) target = $region48
        $region47: #{tpu_custom_call.1} parent=35 // pred_region
          %vm352 = vcmask 7168
          %353 = vst.msk [vmem:[#allocation2] sm:$0xff] %vm352, -inf
          %354 = vst.msk [vmem:[#allocation3] sm:$0xff] %vm352, 0.0
          %vm355 = vcmask 261120
          %356 = vst.msk [vmem:[#allocation4] sm:$0xff] %vm355, 0.0
        $region48: #{tpu_custom_call.1} parent=35 // pred_fallthru
          _
        %v357 = vld [vmem:[%s337] sm:$0xff]
        %v358 = vmul.f32 %v357, 0.125
        %v359 = vld [vmem:[%s273] sm:$0xff]
        %v360 = vld [vmem:[%s283] sm:$0xff]
        %vm361 = vcmask 261120
        %v363 = vsel %vm361, %v358, 0
        %v366 = vsel %vm361, %v359, 0
        %368 = vmatpush.xpose.msra.mxu0 0.0
        %369 = vmatpush.xpose.msra.mxu0 0.0
        %370 = vmatpush.xpose.msra.mxu0 0.0
        %371 = vmatpush.xpose.msra.mxu0 0.0
        %372 = vmatpush.xpose.msra.mxu0 0.0
        %373 = vmatpush.xpose.msra.mxu0 0.0
        %374 = vmatpush.xpose.msra.mxu0 0.0
        %375 = vmatpush.xpose.msra.mxu0 0.0
        %376 = vmatpush.xpose.msra.mxu0 0.0
        %377 = vmatpush.xpose.msra.mxu0 0.0
        %378 = vmatpush.xpose.msra.mxu0 0.0
        %379 = vmatpush.xpose.msra.mxu0 0.0
        %380 = vmatpush.xpose.msra.mxu0 0.0
        %381 = vmatpush.xpose.msra.mxu0 0.0
        %382 = vmatpush.xpose.msra.mxu0 0.0
        %383 = vmatpush.xpose.msra.mxu0 %v366
        %384 = vmatmul.f32.gmra.mxu0 %v363
        %v385 = vpop.f32.mrf.mxu0
        %v386 = vadd.f32 0.0, %v385
        %387 = vdwg.mxu0
        %v388 = vld [vmem:[%s347] sm:$0xff]
        %vm389 = vcmp.ne.s32.totalorder %v388, 0
        %v390 = vsel %vm389, -1e+08, %v386
        %v391 = vld [vmem:[#allocation2] sm:$0xff]
        %vm392 = vcmask 64512
        %v393 = vsel %vm392, %v390, -inf
        %394 = vmax.xlane.f32.xlu0 %v393
        %v395 = vpop.xlane.xlu0 %394
        %v396 = vmax.f32 %v391, %v395
        %v397 = vsub.f32 %v391, %v396
        %v398 = vmul.f32 %v397, 1.442695
        %v399 = vpow.pop %v398
        %401 = vset.pattern.permute.xlu0 0
        %402 = vperm.xlu0 %401, %v396
        %v403 = vpop.permute.xlu0 %402
        %v405 = vsub.f32 %v390, %v403
        %v406 = vmul.f32 %v405, 1.442695
        %v407 = vpow.pop %v406
        %v408 = vld [vmem:[#allocation3] sm:$0xff]
        %v409 = vmul.f32 %v399, %v408
        %v410 = vsel %vm392, %v407, 0.0
        %411 = vadd.xlane.f32.xlu0 %v410
        %v412 = vpop.xlane.xlu0 %411
        %v413 = vadd.f32 %v409, %v412
        %vm414 = vcmask 7168
        %415 = vst.msk [vmem:[#allocation3] sm:$0xff] %vm414, %v413
        %v416 = vld [vmem:[#allocation4] sm:$0xff]
        %418 = vset.pattern.permute.xlu0 0
        %419 = vperm.xlu0 %418, %v399
        %v420 = vpop.permute.xlu0 %419
        %v422 = vmul.f32 %v420, %v416
        %v424 = vsel %vm392, %v407, 0
        %426 = vmatpush.msra.mxu0 0.0
        %427 = vmatpush.msra.mxu0 0.0
        %428 = vmatpush.msra.mxu0 0.0
        %429 = vmatpush.msra.mxu0 0.0
        %430 = vmatpush.msra.mxu0 0.0
        %431 = vmatpush.msra.mxu0 0.0
        %432 = vmatpush.msra.mxu0 0.0
        %433 = vmatpush.msra.mxu0 0.0
        %434 = vmatpush.msra.mxu0 0.0
        %435 = vmatpush.msra.mxu0 0.0
        %436 = vmatpush.msra.mxu0 0.0
        %437 = vmatpush.msra.mxu0 0.0
        %438 = vmatpush.msra.mxu0 0.0
        %439 = vmatpush.msra.mxu0 0.0
        %440 = vmatpush.msra.mxu0 0.0
        %441 = vmatpush.msra.mxu0 %v360
        %442 = vmatmul.f32.gmra.mxu0 %v424
        %v443 = vpop.f32.mrf.mxu0
        %v444 = vadd.f32 0.0, %v443
        %445 = vdwg.mxu0
        %v446 = vadd.f32 %v422, %v444
        %447 = vst.msk [vmem:[#allocation4] sm:$0xff] %vm361, %v446
        %448 = vst.msk [vmem:[#allocation2] sm:$0xff] %vm414, %v396
        // Predicated region
        $region49: #{tpu_custom_call.1} parent=35 // pred_check
          %p449 = pneg %p348
        $region50: #{tpu_custom_call.1} parent=35 // pred_check_branch
          %451 = sbr.rel (%p449) target = $region52
        $region51: #{tpu_custom_call.1} parent=35 // pred_region
          %v452 = vld [vmem:[#allocation3] sm:$0xff]
          %v453 = vrcp.pop %v452
          %v454 = vld [vmem:[#allocation4] sm:$0xff]
          %456 = vset.pattern.permute.xlu0 0
          %457 = vperm.xlu0 %456, %v453
          %v458 = vpop.permute.xlu0 %457
          %v460 = vmul.f32 %v454, %v458
          %461 = vst.msk [vmem:[%s330] sm:$0xff] %vm361, %v460
        $region52: #{tpu_custom_call.1} parent=35 // pred_fallthru
          _
        %s462 = sand.u32 %s167, 1
        %s463 = scalar_lea.sflag [#allocation7], %s462
        %s464 = sand.u32 %s167, 1
        %s465 = smul.addr %s464, 8
        %s466 = scalar_lea.vmem [#allocation10], %s465
        // Predicated region
        $region53: #{tpu_custom_call.1} parent=35 // pred_check
          %p467 = pneg %p177
        $region54: #{tpu_custom_call.1} parent=35 // pred_check_branch
          %469 = sbr.rel (%p467) target = $region56
        $region55: #{tpu_custom_call.1} parent=35 // pred_region
          %471 = vsyncadd %s463, 0
          %s472 = sadd.s32 %s30, %s29
          %s473 = smul.addr %s472, 8
          %s474 = scalar_lea.hbm %s4, %s473
          %s476 = sshll.u32 %s466, 4
          %s477 = int_to_ptr.vmem [resolvable:$true] %s476
          %s478 = sshll.u32 %s474, 4
          %s479 = int_to_ptr.hbm [resolvable:$true] %s478
          %481 = dma.vmem_to_hbm [thread:$0]  %s477, 128, %s479, %s463
        $region56: #{tpu_custom_call.1} parent=35 // pred_fallthru
          _
      $region36: #{tpu_custom_call.1} parent=5 // pred_fallthru
        _
      %p482 = scmp.le.s32.totalorder 2, %s19
      // Predicated region
      $region57: #{tpu_custom_call.1} parent=5 // pred_check
        %p483 = pneg %p482
      $region58: #{tpu_custom_call.1} parent=5 // pred_check_branch
        %485 = sbr.rel (%p483) target = $region60
      $region59: #{tpu_custom_call.1} parent=5 // pred_region
        %s486 = ssub.s32 %s19, 2
        // Predicated region
        $region61: #{tpu_custom_call.1} parent=59 // pred_check
          %p487 = pneg %p183
        $region62: #{tpu_custom_call.1} parent=59 // pred_check_branch
          %489 = sbr.rel (%p487) target = $region64
        $region63: #{tpu_custom_call.1} parent=59 // pred_region
          %s490 = sand.u32 %s168, 1
          %s491 = scalar_lea.sflag [#allocation7], %s490
          %s492 = sand.u32 %s168, 1
          %s493 = smul.addr %s492, 8
          %s494 = scalar_lea.vmem [#allocation10], %s493
          %496 = dma.done %s491, 128
        $region64: #{tpu_custom_call.1} parent=59 // pred_fallthru
          _
      $region60: #{tpu_custom_call.1} parent=5 // pred_fallthru
        _
    $region6: #{tpu_custom_call.1} parent=1 // loop_footer
      %s23 = sadd.s32 1, %s19
    $region7: #{tpu_custom_call.1} parent=1 // loop_footer_branch
      %18 = sbr.rel target = $region3
    $region8: #{tpu_custom_call.1} parent=1 // loop_exit
      _
    %497 = vsyncpa [#allocation6], 1
    %s498 = scalar_lea.sflag [#allocation6], 1
    %499 = vsyncpa %s498, 1
    %500 = vsyncpa [#allocation9], 1
    %s501 = scalar_lea.sflag [#allocation9], 1
    %502 = vsyncpa %s501, 1
    %503 = vsyncpa [#allocation7], 1
    %s504 = scalar_lea.sflag [#allocation7], 1
    %505 = vsyncpa %s504, 1

</llo_original>
